<compile_context>
chip_gen: v7x
topology: tpu7x:2x2x1
jax: 0.10.0
libtpu: 0.0.40
codegen_flags: <defaults>
</compile_context>

<pallas_src>
import jax
import jax.numpy as jnp
from jax.experimental import pallas as pl
from jax.experimental.pallas import tpu as pltpu

_LANES = 128               # vreg lane width
_BLOCK_ROWS = 2048         # sublane rows per block -> 1 MiB f32 per input block
_SPLIT_ROW_THRESHOLD = 512 # engage both v7x TensorCores above this many rows
_MAX_SPLITS = 2            # v7x has 2 TensorCores; extra tiny output block elsewhere


def _round_up(x, m):
    return ((x + m - 1) // m) * m


def _make_smooth_l1_kernel(br, steps, valid_rows, need_mask):
    """Builds the per-shape kernel (br/steps/valid_rows are static ints)."""

    def kernel(pp, cp, sp, wp, pt, ct, st, wt, out_ref):
        # pp..wt  : (br, 128) blocks of the 4 pred / 4 target heads.
        # out_ref : (1, 4, 8, 128) per-split partial sums, resident across the
        #           "arbitrary" reduction axis (accumulated in place).
        step = pl.program_id(1)

        @pl.when(step == 0)
        def _():
            out_ref[...] = jnp.zeros_like(out_ref)

        if need_mask:
            # Rows at/after `valid_rows` are out-of-bounds garbage from the
            # partial last block -> select exactly 0 for them (select, not
            # multiply, so NaN/Inf garbage cannot leak through).
            row0 = (pl.program_id(0) * steps + step) * br
            row_ids = jax.lax.broadcasted_iota(jnp.int32, (br, _LANES), 0) + row0
            mask = row_ids < valid_rows
        else:
            mask = None

        def head_partial(pred_ref, targ_ref):
            d = pred_ref[...].astype(jnp.float32) - targ_ref[...].astype(jnp.float32)
            ad = jnp.abs(d)
            # F.smooth_l1_loss, beta=1.0, branchless clamp form:
            #   c = min(|d|, 1);  pe = c * (|d| - 0.5 * c)
            #   (|d| < 1 -> 0.5*d^2 ; else |d| - 0.5)
            cl = jnp.minimum(ad, 1.0)
            pe = cl * (ad - 0.5 * cl)
            if mask is not None:
                pe = jnp.where(mask, pe, 0.0)
            # Reduce over the leading (vreg-group) axis only: pure VPU vreg
            # adds, no cross-lane / cross-sublane (XLU) work in the hot loop.
            return pe.reshape(br // 8, 8, _LANES).sum(axis=0)

        out_ref[0, 0] += head_partial(pp, pt)
        out_ref[0, 1] += head_partial(cp, ct)
        out_ref[0, 2] += head_partial(sp, st)
        out_ref[0, 3] += head_partial(wp, wt)

    return kernel


@jax.jit
def _smooth_l1_head_sums(pp, cp, sp, wp, pt, ct, st, wt):
    """Returns (4,) f32 per-head smooth-L1 *sums* (mean = sum / head.size)."""
    shapes = {a.shape for a in (pp, cp, sp, wp, pt, ct, st, wt)}
    assert len(shapes) == 1, "all prediction/target maps must share one shape"

    n = pp.size
    rows = pl.cdiv(n, _LANES)
    needs_lane_pad = (n % _LANES) != 0

    def to_rows(a):
        flat = a.reshape(-1)                       # free reshape (contiguous)
        if needs_lane_pad:
            # TODO(synk): rare fallback (grasp maps are normally 128-aligned);
            # zero pad to the next 128 boundary -> zero Huber contribution.
            flat = jnp.pad(flat, (0, rows * _LANES - flat.shape[0]))
        return flat.reshape(rows, _LANES)          # free when n % 128 == 0

    inputs = [to_rows(a) for a in (pp, cp, sp, wp, pt, ct, st, wt)]

    # Megacore split decoupled from block size: both v7x TCs whenever there is
    # a reasonable amount of work (harmless on single-TC v5e/v6e).
    splits = _MAX_SPLITS if rows >= _SPLIT_ROW_THRESHOLD else 1
    rows_per_split = _round_up(pl.cdiv(rows, splits), 16)  # 16: bf16-tile safe
    br = min(_BLOCK_ROWS, rows_per_split)
    steps = pl.cdiv(rows_per_split, br)
    # Static flag: only emit the in-kernel mask when some block can overrun.
    need_mask = (splits * steps * br) != rows

    in_spec = pl.BlockSpec((br, _LANES), lambda c, i: (c * steps + i, 0))
    out_spec = pl.BlockSpec((1, 4, 8, _LANES), lambda c, i: (c, 0, 0, 0))

    # 8 inputs x 2 pipeline buffers x block bytes + headroom for output/misc.
    # Explicit because v5e's default scoped-VMEM limit is only 16 MiB; with
    # br=2048 f32 this is ~20 MiB, well under v6e/v7x scoped defaults.
    block_bytes = br * _LANES * jnp.dtype(pp.dtype).itemsize
    vmem_bytes = 8 * 2 * block_bytes + (4 << 20)

    kernel = _make_smooth_l1_kernel(br, steps, rows, need_mask)

    partials = pl.pallas_call(
        kernel,
        out_shape=jax.ShapeDtypeStruct((splits, 4, 8, _LANES), jnp.float32),
        grid_spec=pltpu.PrefetchScalarGridSpec(
            num_scalar_prefetch=0,
            grid=(splits, steps),
            in_specs=[in_spec] * 8,
            out_specs=out_spec,
        ),
        compiler_params=pltpu.CompilerParams(
            dimension_semantics=("parallel", "arbitrary"),
            vmem_limit_bytes=int(vmem_bytes),
        ),
    )(*inputs)

    # Tiny final reduce (splits x sublanes x lanes) done once, in the wrapper.
    return partials.sum(axis=(0, 2, 3))  # (4,)


class GraspModel:
    """JAX/Pallas port of the abstract grasp model interface."""

    def __call__(self, x_in):
        raise NotImplementedError()

    # Mirrors PyTorch compute_loss(xc, yc): calls forward (abstract here).
    def compute_loss(self, xc, yc):
        preds = self(xc)
        return self.compute_loss_from_preds(preds, yc)

    def compute_loss_from_preds(self, preds, targets):
        """Same semantics as PyTorch compute_loss, with the four prediction
        maps supplied directly (since forward is abstract)."""
        pos_pred, cos_pred, sin_pred, width_pred = preds
        y_pos, y_cos, y_sin, y_width = targets

        sums = _smooth_l1_head_sums(
            pos_pred, cos_pred, sin_pred, width_pred,
            y_pos, y_cos, y_sin, y_width,
        )
        # mean reduction per head (all four heads share a shape; asserted in
        # the wrapper).  Pad/mask regions contribute exactly 0 to the sums.
        means = sums / jnp.float32(pos_pred.size)
        p_loss, cos_loss, sin_loss, width_loss = (
            means[0], means[1], means[2], means[3]
        )
        return {
            "loss": p_loss + cos_loss + sin_loss + width_loss,
            "losses": {
                "p_loss": p_loss,
                "cos_loss": cos_loss,
                "sin_loss": sin_loss,
                "width_loss": width_loss,
            },
            "pred": {
                "pos": pos_pred,
                "cos": cos_pred,
                "sin": sin_pred,
                "width": width_pred,
            },
        }

    def predict(self, xc):
        pos_pred, cos_pred, sin_pred, width_pred = self(xc)
        return {"pos": pos_pred, "cos": cos_pred,
                "sin": sin_pred, "width": width_pred}

    def predict_from_preds(self, preds):
        pos_pred, cos_pred, sin_pred, width_pred = preds
        return {"pos": pos_pred, "cos": cos_pred,
                "sin": sin_pred, "width": width_pred}


def _ref_smooth_l1_mean(p, t):
    d = p.astype(jnp.float32) - t.astype(jnp.float32)
    ad = jnp.abs(d)
    return jnp.mean(jnp.where(ad < 1.0, 0.5 * d * d, ad - 0.5))


if __name__ == "__main__":
    key = jax.random.PRNGKey(0)
    model = GraspModel()

    # Shapes chosen to exercise every code path while staying small:
    #  (2,1,16,16)  n=512   : 128-aligned, rows < block  -> masked partial block
    #  (2,1,24,24)  n=1152  : rows=9 (not 8-aligned)     -> masked last block
    #  (2,1,30,30)  n=1800  : not 128-aligned            -> zero-pad fallback
    #  (1,1,256,256) n=65536: rows=512                   -> 2-way (megacore) split
    for (B, C, H, W) in [(2, 1, 16, 16), (2, 1, 24, 24),
                         (2, 1, 30, 30), (1, 1, 256, 256)]:
        ks = jax.random.split(key, 8)
        preds = tuple(
            jax.random.normal(ks[i], (B, C, H, W), dtype=jnp.float32)
            for i in range(4)
        )
        targets = tuple(
            jax.random.normal(ks[4 + i], (B, C, H, W), dtype=jnp.float32)
            for i in range(4)
        )

        out = model.compute_loss_from_preds(preds, targets)
        jax.block_until_ready(out["loss"])

        # Cross-check against a pure-JAX reference of F.smooth_l1_loss semantics.
        ref_losses = [_ref_smooth_l1_mean(p, t) for p, t in zip(preds, targets)]
        ref_total = sum(ref_losses)
        assert jnp.allclose(out["loss"], ref_total, rtol=1e-5, atol=1e-5)
        for name, ref in zip(("p_loss", "cos_loss", "sin_loss", "width_loss"),
                             ref_losses):
            assert jnp.allclose(out["losses"][name], ref, rtol=1e-5, atol=1e-5)

    print("KERNEL_OK")
</pallas_src>

<mosaic_0001>
module attributes {stable_mosaic.version = 11 : i64} {
  func.func @kernel(%arg0: i32, %arg1: i32, %arg2: memref<16x128xf32, #tpu.memory_space<vmem>>, %arg3: memref<16x128xf32, #tpu.memory_space<vmem>>, %arg4: memref<16x128xf32, #tpu.memory_space<vmem>>, %arg5: memref<16x128xf32, #tpu.memory_space<vmem>>, %arg6: memref<16x128xf32, #tpu.memory_space<vmem>>, %arg7: memref<16x128xf32, #tpu.memory_space<vmem>>, %arg8: memref<16x128xf32, #tpu.memory_space<vmem>>, %arg9: memref<16x128xf32, #tpu.memory_space<vmem>>, %arg10: memref<1x4x8x128xf32, #tpu.memory_space<vmem>>) attributes {dimension_semantics = [#tpu.dimension_semantics<parallel>, #tpu.dimension_semantics<arbitrary>], iteration_bounds = array<i64: 1, 1>, scalar_prefetch = 0 : i64, scratch_operands = 0 : i64, tpu.core_type = #tpu.core_type<tc>, window_params = [{transform_indices = @transform_0, window_bounds = array<i64: 16, 128>}, {transform_indices = @transform_1, window_bounds = array<i64: 16, 128>}, {transform_indices = @transform_2, window_bounds = array<i64: 16, 128>}, {transform_indices = @transform_3, window_bounds = array<i64: 16, 128>}, {transform_indices = @transform_4, window_bounds = array<i64: 16, 128>}, {transform_indices = @transform_5, window_bounds = array<i64: 16, 128>}, {transform_indices = @transform_6, window_bounds = array<i64: 16, 128>}, {transform_indices = @transform_7, window_bounds = array<i64: 16, 128>}, {transform_indices = @transform_8, window_bounds = array<i64: 1, 4, 8, 128>}]} {
    %c0_i32 = arith.constant 0 : i32
    %0 = arith.cmpi eq, %arg1, %c0_i32 : i32
    %1 = arith.extui %0 : i1 to i32
    %c0_i32_0 = arith.constant 0 : i32
    %2 = arith.cmpi ne, %1, %c0_i32_0 : i32
    scf.if %2 {
      %cst_60 = arith.constant 0.000000e+00 : f32
      %91 = vector.broadcast %cst_60 : f32 to vector<1x4x8x128xf32>
      %c0_61 = arith.constant 0 : index
      %c0_62 = arith.constant 0 : index
      %c0_63 = arith.constant 0 : index
      %c0_64 = arith.constant 0 : index
      %92 = vector.load %arg10[%c0_61, %c0_62, %c0_63, %c0_64] : memref<1x4x8x128xf32, #tpu.memory_space<vmem>>, vector<1x4x8x128xf32>
      tpu.vector_store %arg10[%c0_61, %c0_62, %c0_63, %c0_64], %91 {strides = array<i32>} : memref<1x4x8x128xf32, #tpu.memory_space<vmem>>, vector<1x4x8x128xf32>,
    } else {
    }
    %c1_i32 = arith.constant 1 : i32
    %3 = arith.muli %arg0, %c1_i32 : i32
    %4 = arith.addi %3, %arg1 : i32
    %c16_i32 = arith.constant 16 : i32
    %5 = arith.muli %4, %c16_i32 : i32
    %6 = tpu.iota {dimensions = array<i32: 0>} : vector<16x128xi32>
    %7 = vector.broadcast %5 : i32 to vector<16x128xi32>
    %8 = arith.addi %6, %7 : vector<16x128xi32>
    %c4_i32 = arith.constant 4 : i32
    %9 = vector.broadcast %c4_i32 : i32 to vector<16x128xi32>
    %10 = arith.cmpi slt, %8, %9 : vector<16x128xi32>
    %c0 = arith.constant 0 : index
    %c0_1 = arith.constant 0 : index
    %c0_2 = arith.constant 0 : index
    %c0_3 = arith.constant 0 : index
    %11 = vector.load %arg10[%c0, %c0_1, %c0_2, %c0_3] : memref<1x4x8x128xf32, #tpu.memory_space<vmem>>, vector<1x1x8x128xf32>
    %12 = vector.shape_cast %11 : vector<1x1x8x128xf32> to vector<8x128xf32>
    %c0_4 = arith.constant 0 : index
    %c0_5 = arith.constant 0 : index
    %13 = vector.load %arg2[%c0_4, %c0_5] : memref<16x128xf32, #tpu.memory_space<vmem>>, vector<16x128xf32>
    %c0_6 = arith.constant 0 : index
    %c0_7 = arith.constant 0 : index
    %14 = vector.load %arg6[%c0_6, %c0_7] : memref<16x128xf32, #tpu.memory_space<vmem>>, vector<16x128xf32>
    %15 = arith.subf %13, %14 : vector<16x128xf32>
    %16 = math.absf %15 : vector<16x128xf32>
    %cst = arith.constant 1.000000e+00 : f32
    %17 = vector.broadcast %cst : f32 to vector<16x128xf32>
    %18 = arith.minimumf %16, %17 : vector<16x128xf32>
    %cst_8 = arith.constant 5.000000e-01 : f32
    %19 = vector.broadcast %cst_8 : f32 to vector<16x128xf32>
    %20 = arith.mulf %19, %18 : vector<16x128xf32>
    %21 = arith.subf %16, %20 : vector<16x128xf32>
    %22 = arith.mulf %18, %21 : vector<16x128xf32>
    %cst_9 = arith.constant 0.000000e+00 : f32
    %23 = vector.broadcast %cst_9 : f32 to vector<16x128xf32>
    %24 = arith.select %10, %22, %23 : vector<16x128xi1>, vector<16x128xf32>
    %25 = vector.shape_cast %24 : vector<16x128xf32> to vector<2x8x128xf32>
    %cst_10 = arith.constant dense<0.000000e+00> : vector<8x128xf32>
    %26 = vector.multi_reduction <add>, %25, %cst_10 [0] : vector<2x8x128xf32> to vector<8x128xf32>
    %27 = arith.addf %12, %26 : vector<8x128xf32>
    %c0_11 = arith.constant 0 : index
    %c0_12 = arith.constant 0 : index
    %c0_13 = arith.constant 0 : index
    %c0_14 = arith.constant 0 : index
    %28 = vector.load %arg10[%c0_11, %c0_12, %c0_13, %c0_14] : memref<1x4x8x128xf32, #tpu.memory_space<vmem>>, vector<1x1x8x128xf32>
    %29 = vector.shape_cast %28 : vector<1x1x8x128xf32> to vector<8x128xf32>
    %30 = vector.shape_cast %27 : vector<8x128xf32> to vector<1x1x8x128xf32>
    tpu.vector_store %arg10[%c0_11, %c0_12, %c0_13, %c0_14], %30 {strides = array<i32>} : memref<1x4x8x128xf32, #tpu.memory_space<vmem>>, vector<1x1x8x128xf32>,
    %c0_15 = arith.constant 0 : index
    %c1 = arith.constant 1 : index
    %c0_16 = arith.constant 0 : index
    %c0_17 = arith.constant 0 : index
    %31 = vector.load %arg10[%c0_15, %c1, %c0_16, %c0_17] : memref<1x4x8x128xf32, #tpu.memory_space<vmem>>, vector<1x1x8x128xf32>
    %32 = vector.shape_cast %31 : vector<1x1x8x128xf32> to vector<8x128xf32>
    %c0_18 = arith.constant 0 : index
    %c0_19 = arith.constant 0 : index
    %33 = vector.load %arg3[%c0_18, %c0_19] : memref<16x128xf32, #tpu.memory_space<vmem>>, vector<16x128xf32>
    %c0_20 = arith.constant 0 : index
    %c0_21 = arith.constant 0 : index
    %34 = vector.load %arg7[%c0_20, %c0_21] : memref<16x128xf32, #tpu.memory_space<vmem>>, vector<16x128xf32>
    %35 = arith.subf %33, %34 : vector<16x128xf32>
    %36 = math.absf %35 : vector<16x128xf32>
    %cst_22 = arith.constant 1.000000e+00 : f32
    %37 = vector.broadcast %cst_22 : f32 to vector<16x128xf32>
    %38 = arith.minimumf %36, %37 : vector<16x128xf32>
    %cst_23 = arith.constant 5.000000e-01 : f32
    %39 = vector.broadcast %cst_23 : f32 to vector<16x128xf32>
    %40 = arith.mulf %39, %38 : vector<16x128xf32>
    %41 = arith.subf %36, %40 : vector<16x128xf32>
    %42 = arith.mulf %38, %41 : vector<16x128xf32>
    %cst_24 = arith.constant 0.000000e+00 : f32
    %43 = vector.broadcast %cst_24 : f32 to vector<16x128xf32>
    %44 = arith.select %10, %42, %43 : vector<16x128xi1>, vector<16x128xf32>
    %45 = vector.shape_cast %44 : vector<16x128xf32> to vector<2x8x128xf32>
    %cst_25 = arith.constant dense<0.000000e+00> : vector<8x128xf32>
    %46 = vector.multi_reduction <add>, %45, %cst_25 [0] : vector<2x8x128xf32> to vector<8x128xf32>
    %47 = arith.addf %32, %46 : vector<8x128xf32>
    %c0_26 = arith.constant 0 : index
    %c1_27 = arith.constant 1 : index
    %c0_28 = arith.constant 0 : index
    %c0_29 = arith.constant 0 : index
    %48 = vector.load %arg10[%c0_26, %c1_27, %c0_28, %c0_29] : memref<1x4x8x128xf32, #tpu.memory_space<vmem>>, vector<1x1x8x128xf32>
    %49 = vector.shape_cast %48 : vector<1x1x8x128xf32> to vector<8x128xf32>
    %50 = vector.shape_cast %47 : vector<8x128xf32> to vector<1x1x8x128xf32>
    tpu.vector_store %arg10[%c0_26, %c1_27, %c0_28, %c0_29], %50 {strides = array<i32>} : memref<1x4x8x128xf32, #tpu.memory_space<vmem>>, vector<1x1x8x128xf32>,
    %c0_30 = arith.constant 0 : index
    %c2 = arith.constant 2 : index
    %c0_31 = arith.constant 0 : index
    %c0_32 = arith.constant 0 : index
    %51 = vector.load %arg10[%c0_30, %c2, %c0_31, %c0_32] : memref<1x4x8x128xf32, #tpu.memory_space<vmem>>, vector<1x1x8x128xf32>
    %52 = vector.shape_cast %51 : vector<1x1x8x128xf32> to vector<8x128xf32>
    %c0_33 = arith.constant 0 : index
    %c0_34 = arith.constant 0 : index
    %53 = vector.load %arg4[%c0_33, %c0_34] : memref<16x128xf32, #tpu.memory_space<vmem>>, vector<16x128xf32>
    %c0_35 = arith.constant 0 : index
    %c0_36 = arith.constant 0 : index
    %54 = vector.load %arg8[%c0_35, %c0_36] : memref<16x128xf32, #tpu.memory_space<vmem>>, vector<16x128xf32>
    %55 = arith.subf %53, %54 : vector<16x128xf32>
    %56 = math.absf %55 : vector<16x128xf32>
    %cst_37 = arith.constant 1.000000e+00 : f32
    %57 = vector.broadcast %cst_37 : f32 to vector<16x128xf32>
    %58 = arith.minimumf %56, %57 : vector<16x128xf32>
    %cst_38 = arith.constant 5.000000e-01 : f32
    %59 = vector.broadcast %cst_38 : f32 to vector<16x128xf32>
    %60 = arith.mulf %59, %58 : vector<16x128xf32>
    %61 = arith.subf %56, %60 : vector<16x128xf32>
    %62 = arith.mulf %58, %61 : vector<16x128xf32>
    %cst_39 = arith.constant 0.000000e+00 : f32
    %63 = vector.broadcast %cst_39 : f32 to vector<16x128xf32>
    %64 = arith.select %10, %62, %63 : vector<16x128xi1>, vector<16x128xf32>
    %65 = vector.shape_cast %64 : vector<16x128xf32> to vector<2x8x128xf32>
    %cst_40 = arith.constant dense<0.000000e+00> : vector<8x128xf32>
    %66 = vector.multi_reduction <add>, %65, %cst_40 [0] : vector<2x8x128xf32> to vector<8x128xf32>
    %67 = arith.addf %52, %66 : vector<8x128xf32>
    %c0_41 = arith.constant 0 : index
    %c2_42 = arith.constant 2 : index
    %c0_43 = arith.constant 0 : index
    %c0_44 = arith.constant 0 : index
    %68 = vector.load %arg10[%c0_41, %c2_42, %c0_43, %c0_44] : memref<1x4x8x128xf32, #tpu.memory_space<vmem>>, vector<1x1x8x128xf32>
    %69 = vector.shape_cast %68 : vector<1x1x8x128xf32> to vector<8x128xf32>
    %70 = vector.shape_cast %67 : vector<8x128xf32> to vector<1x1x8x128xf32>
    tpu.vector_store %arg10[%c0_41, %c2_42, %c0_43, %c0_44], %70 {strides = array<i32>} : memref<1x4x8x128xf32, #tpu.memory_space<vmem>>, vector<1x1x8x128xf32>,
    %c0_45 = arith.constant 0 : index
    %c3 = arith.constant 3 : index
    %c0_46 = arith.constant 0 : index
    %c0_47 = arith.constant 0 : index
    %71 = vector.load %arg10[%c0_45, %c3, %c0_46, %c0_47] : memref<1x4x8x128xf32, #tpu.memory_space<vmem>>, vector<1x1x8x128xf32>
    %72 = vector.shape_cast %71 : vector<1x1x8x128xf32> to vector<8x128xf32>
    %c0_48 = arith.constant 0 : index
    %c0_49 = arith.constant 0 : index
    %73 = vector.load %arg5[%c0_48, %c0_49] : memref<16x128xf32, #tpu.memory_space<vmem>>, vector<16x128xf32>
    %c0_50 = arith.constant 0 : index
    %c0_51 = arith.constant 0 : index
    %74 = vector.load %arg9[%c0_50, %c0_51] : memref<16x128xf32, #tpu.memory_space<vmem>>, vector<16x128xf32>
    %75 = arith.subf %73, %74 : vector<16x128xf32>
    %76 = math.absf %75 : vector<16x128xf32>
    %cst_52 = arith.constant 1.000000e+00 : f32
    %77 = vector.broadcast %cst_52 : f32 to vector<16x128xf32>
    %78 = arith.minimumf %76, %77 : vector<16x128xf32>
    %cst_53 = arith.constant 5.000000e-01 : f32
    %79 = vector.broadcast %cst_53 : f32 to vector<16x128xf32>
    %80 = arith.mulf %79, %78 : vector<16x128xf32>
    %81 = arith.subf %76, %80 : vector<16x128xf32>
    %82 = arith.mulf %78, %81 : vector<16x128xf32>
    %cst_54 = arith.constant 0.000000e+00 : f32
    %83 = vector.broadcast %cst_54 : f32 to vector<16x128xf32>
    %84 = arith.select %10, %82, %83 : vector<16x128xi1>, vector<16x128xf32>
    %85 = vector.shape_cast %84 : vector<16x128xf32> to vector<2x8x128xf32>
    %cst_55 = arith.constant dense<0.000000e+00> : vector<8x128xf32>
    %86 = vector.multi_reduction <add>, %85, %cst_55 [0] : vector<2x8x128xf32> to vector<8x128xf32>
    %87 = arith.addf %72, %86 : vector<8x128xf32>
    %c0_56 = arith.constant 0 : index
    %c3_57 = arith.constant 3 : index
    %c0_58 = arith.constant 0 : index
    %c0_59 = arith.constant 0 : index
    %88 = vector.load %arg10[%c0_56, %c3_57, %c0_58, %c0_59] : memref<1x4x8x128xf32, #tpu.memory_space<vmem>>, vector<1x1x8x128xf32>
    %89 = vector.shape_cast %88 : vector<1x1x8x128xf32> to vector<8x128xf32>
    %90 = vector.shape_cast %87 : vector<8x128xf32> to vector<1x1x8x128xf32>
    tpu.vector_store %arg10[%c0_56, %c3_57, %c0_58, %c0_59], %90 {strides = array<i32>} : memref<1x4x8x128xf32, #tpu.memory_space<vmem>>, vector<1x1x8x128xf32>,
    return
  }
  func.func @transform_0(%arg0: i32, %arg1: i32) -> (i32, i32) {
    %c1_i32 = arith.constant 1 : i32
    %0 = arith.muli %arg0, %c1_i32 : i32
    %1 = arith.addi %0, %arg1 : i32
    %c0_i32 = arith.constant 0 : i32
    %c0_i32_0 = arith.constant 0 : i32
    return %1, %c0_i32 : i32, i32
  }
  func.func @transform_1(%arg0: i32, %arg1: i32) -> (i32, i32) {
    %c1_i32 = arith.constant 1 : i32
    %0 = arith.muli %arg0, %c1_i32 : i32
    %1 = arith.addi %0, %arg1 : i32
    %c0_i32 = arith.constant 0 : i32
    %c0_i32_0 = arith.constant 0 : i32
    return %1, %c0_i32 : i32, i32
  }
  func.func @transform_2(%arg0: i32, %arg1: i32) -> (i32, i32) {
    %c1_i32 = arith.constant 1 : i32
    %0 = arith.muli %arg0, %c1_i32 : i32
    %1 = arith.addi %0, %arg1 : i32
    %c0_i32 = arith.constant 0 : i32
    %c0_i32_0 = arith.constant 0 : i32
    return %1, %c0_i32 : i32, i32
  }
  func.func @transform_3(%arg0: i32, %arg1: i32) -> (i32, i32) {
    %c1_i32 = arith.constant 1 : i32
    %0 = arith.muli %arg0, %c1_i32 : i32
    %1 = arith.addi %0, %arg1 : i32
    %c0_i32 = arith.constant 0 : i32
    %c0_i32_0 = arith.constant 0 : i32
    return %1, %c0_i32 : i32, i32
  }
  func.func @transform_4(%arg0: i32, %arg1: i32) -> (i32, i32) {
    %c1_i32 = arith.constant 1 : i32
    %0 = arith.muli %arg0, %c1_i32 : i32
    %1 = arith.addi %0, %arg1 : i32
    %c0_i32 = arith.constant 0 : i32
    %c0_i32_0 = arith.constant 0 : i32
    return %1, %c0_i32 : i32, i32
  }
  func.func @transform_5(%arg0: i32, %arg1: i32) -> (i32, i32) {
    %c1_i32 = arith.constant 1 : i32
    %0 = arith.muli %arg0, %c1_i32 : i32
    %1 = arith.addi %0, %arg1 : i32
    %c0_i32 = arith.constant 0 : i32
    %c0_i32_0 = arith.constant 0 : i32
    return %1, %c0_i32 : i32, i32
  }
  func.func @transform_6(%arg0: i32, %arg1: i32) -> (i32, i32) {
    %c1_i32 = arith.constant 1 : i32
    %0 = arith.muli %arg0, %c1_i32 : i32
    %1 = arith.addi %0, %arg1 : i32
    %c0_i32 = arith.constant 0 : i32
    %c0_i32_0 = arith.constant 0 : i32
    return %1, %c0_i32 : i32, i32
  }
  func.func @transform_7(%arg0: i32, %arg1: i32) -> (i32, i32) {
    %c1_i32 = arith.constant 1 : i32
    %0 = arith.muli %arg0, %c1_i32 : i32
    %1 = arith.addi %0, %arg1 : i32
    %c0_i32 = arith.constant 0 : i32
    %c0_i32_0 = arith.constant 0 : i32
    return %1, %c0_i32 : i32, i32
  }
  func.func @transform_8(%arg0: i32, %arg1: i32) -> (i32, i32, i32, i32) {
    %c0_i32 = arith.constant 0 : i32
    %c0_i32_0 = arith.constant 0 : i32
    %c0_i32_1 = arith.constant 0 : i32
    %c0_i32_2 = arith.constant 0 : i32
    return %arg0, %c0_i32, %c0_i32_0, %c0_i32_1 : i32, i32, i32, i32
  }
}

</mosaic_0001>

<llo_original>
// kernel: _smooth_l1_head_sums.1
$region0: #{_smooth_l1_head_sums.1}
  #allocation0 [shape = 'u32[]', space=smem, size = 0x4, offset = 0x4, fixed_abs, tag = 'smem constant byte address 0x4 - core index']
  #allocation1 [shape = 'u32[144,128]{1,0:T(1,128)}', space=vmem, size = 0x12000, scoped, tag = 'internal scratch']
  %s0 = inlined_call_operand.vmem [shape: f32[4,128], index: 0, kind: input, shape index: {}]
  %s1 = inlined_call_operand.vmem [shape: f32[4,128], index: 1, kind: input, shape index: {}]
  %s2 = inlined_call_operand.vmem [shape: f32[4,128], index: 2, kind: input, shape index: {}]
  %s3 = inlined_call_operand.vmem [shape: f32[4,128], index: 3, kind: input, shape index: {}]
  %s4 = inlined_call_operand.vmem [shape: f32[4,128], index: 4, kind: input, shape index: {}]
  %s5 = inlined_call_operand.vmem [shape: f32[4,128], index: 5, kind: input, shape index: {}]
  %s6 = inlined_call_operand.vmem [shape: f32[4,128], index: 6, kind: input, shape index: {}]
  %s7 = inlined_call_operand.vmem [shape: f32[4,128], index: 7, kind: input, shape index: {}]
  %s8 = inlined_call_operand.vmem [shape: f32[1,4,8,128], index: 8, kind: output, shape index: {}]
  %s9 = sld [smem:[#allocation0]]
  $region46: #{_smooth_l1_head_sums.1} parent=0
    _
  %s11 = ssub.s32 1, %s9
  %s12 = scalar_select 0, %s11, %s9
  // Predicated region
  $region2: #{_smooth_l1_head_sums.1} parent=0 // pred_check
    _
  $region3: #{_smooth_l1_head_sums.1} parent=0 // pred_check_branch
    %14 = sbr.rel (0) target = $region5
  $region4: #{_smooth_l1_head_sums.1} parent=0 // pred_region
    %s15 = sadd.s32 0, 0
    %s16 = smul.u32 4, %s15
    %s17 = ssub.s32 1, %s16
    %s18 = smul.u32 64, %s17
    %p19 = scmp.lt.s32.totalorder %s16, 0
    %s20 = scalar_select %p19, %s16, 0
    %s21 = smul.addr %s20, 4
    %s22 = scalar_lea.vmem %s0, %s21
    %s23 = sadd.s32 0, 0
    %s24 = smul.u32 4, %s23
    %s25 = ssub.s32 1, %s24
    %s26 = smul.u32 64, %s25
  $region5: #{_smooth_l1_head_sums.1} parent=0 // pred_fallthru
    _
  // Predicated region
  $region6: #{_smooth_l1_head_sums.1} parent=0 // pred_check
    _
  $region7: #{_smooth_l1_head_sums.1} parent=0 // pred_check_branch
    %28 = sbr.rel (0) target = $region9
  $region8: #{_smooth_l1_head_sums.1} parent=0 // pred_region
    %s29 = sadd.s32 0, 0
    %s30 = smul.u32 4, %s29
    %s31 = ssub.s32 1, %s30
    %s32 = smul.u32 64, %s31
    %p33 = scmp.lt.s32.totalorder %s30, 0
    %s34 = scalar_select %p33, %s30, 0
    %s35 = smul.addr %s34, 4
    %s36 = scalar_lea.vmem %s1, %s35
    %s37 = sadd.s32 0, 0
    %s38 = smul.u32 4, %s37
    %s39 = ssub.s32 1, %s38
    %s40 = smul.u32 64, %s39
  $region9: #{_smooth_l1_head_sums.1} parent=0 // pred_fallthru
    _
  // Predicated region
  $region10: #{_smooth_l1_head_sums.1} parent=0 // pred_check
    _
  $region11: #{_smooth_l1_head_sums.1} parent=0 // pred_check_branch
    %42 = sbr.rel (0) target = $region13
  $region12: #{_smooth_l1_head_sums.1} parent=0 // pred_region
    %s43 = sadd.s32 0, 0
    %s44 = smul.u32 4, %s43
    %s45 = ssub.s32 1, %s44
    %s46 = smul.u32 64, %s45
    %p47 = scmp.lt.s32.totalorder %s44, 0
    %s48 = scalar_select %p47, %s44, 0
    %s49 = smul.addr %s48, 4
    %s50 = scalar_lea.vmem %s2, %s49
    %s51 = sadd.s32 0, 0
    %s52 = smul.u32 4, %s51
    %s53 = ssub.s32 1, %s52
    %s54 = smul.u32 64, %s53
  $region13: #{_smooth_l1_head_sums.1} parent=0 // pred_fallthru
    _
  // Predicated region
  $region14: #{_smooth_l1_head_sums.1} parent=0 // pred_check
    _
  $region15: #{_smooth_l1_head_sums.1} parent=0 // pred_check_branch
    %56 = sbr.rel (0) target = $region17
  $region16: #{_smooth_l1_head_sums.1} parent=0 // pred_region
    %s57 = sadd.s32 0, 0
    %s58 = smul.u32 4, %s57
    %s59 = ssub.s32 1, %s58
    %s60 = smul.u32 64, %s59
    %p61 = scmp.lt.s32.totalorder %s58, 0
    %s62 = scalar_select %p61, %s58, 0
    %s63 = smul.addr %s62, 4
    %s64 = scalar_lea.vmem %s3, %s63
    %s65 = sadd.s32 0, 0
    %s66 = smul.u32 4, %s65
    %s67 = ssub.s32 1, %s66
    %s68 = smul.u32 64, %s67
  $region17: #{_smooth_l1_head_sums.1} parent=0 // pred_fallthru
    _
  // Predicated region
  $region18: #{_smooth_l1_head_sums.1} parent=0 // pred_check
    _
  $region19: #{_smooth_l1_head_sums.1} parent=0 // pred_check_branch
    %70 = sbr.rel (0) target = $region21
  $region20: #{_smooth_l1_head_sums.1} parent=0 // pred_region
    %s71 = sadd.s32 0, 0
    %s72 = smul.u32 4, %s71
    %s73 = ssub.s32 1, %s72
    %s74 = smul.u32 64, %s73
    %p75 = scmp.lt.s32.totalorder %s72, 0
    %s76 = scalar_select %p75, %s72, 0
    %s77 = smul.addr %s76, 4
    %s78 = scalar_lea.vmem %s4, %s77
    %s79 = sadd.s32 0, 0
    %s80 = smul.u32 4, %s79
    %s81 = ssub.s32 1, %s80
    %s82 = smul.u32 64, %s81
  $region21: #{_smooth_l1_head_sums.1} parent=0 // pred_fallthru
    _
  // Predicated region
  $region22: #{_smooth_l1_head_sums.1} parent=0 // pred_check
    _
  $region23: #{_smooth_l1_head_sums.1} parent=0 // pred_check_branch
    %84 = sbr.rel (0) target = $region25
  $region24: #{_smooth_l1_head_sums.1} parent=0 // pred_region
    %s85 = sadd.s32 0, 0
    %s86 = smul.u32 4, %s85
    %s87 = ssub.s32 1, %s86
    %s88 = smul.u32 64, %s87
    %p89 = scmp.lt.s32.totalorder %s86, 0
    %s90 = scalar_select %p89, %s86, 0
    %s91 = smul.addr %s90, 4
    %s92 = scalar_lea.vmem %s5, %s91
    %s93 = sadd.s32 0, 0
    %s94 = smul.u32 4, %s93
    %s95 = ssub.s32 1, %s94
    %s96 = smul.u32 64, %s95
  $region25: #{_smooth_l1_head_sums.1} parent=0 // pred_fallthru
    _
  // Predicated region
  $region26: #{_smooth_l1_head_sums.1} parent=0 // pred_check
    _
  $region27: #{_smooth_l1_head_sums.1} parent=0 // pred_check_branch
    %98 = sbr.rel (0) target = $region29
  $region28: #{_smooth_l1_head_sums.1} parent=0 // pred_region
    %s99 = sadd.s32 0, 0
    %s100 = smul.u32 4, %s99
    %s101 = ssub.s32 1, %s100
    %s102 = smul.u32 64, %s101
    %p103 = scmp.lt.s32.totalorder %s100, 0
    %s104 = scalar_select %p103, %s100, 0
    %s105 = smul.addr %s104, 4
    %s106 = scalar_lea.vmem %s6, %s105
    %s107 = sadd.s32 0, 0
    %s108 = smul.u32 4, %s107
    %s109 = ssub.s32 1, %s108
    %s110 = smul.u32 64, %s109
  $region29: #{_smooth_l1_head_sums.1} parent=0 // pred_fallthru
    _
  // Predicated region
  $region30: #{_smooth_l1_head_sums.1} parent=0 // pred_check
    _
  $region31: #{_smooth_l1_head_sums.1} parent=0 // pred_check_branch
    %112 = sbr.rel (0) target = $region33
  $region32: #{_smooth_l1_head_sums.1} parent=0 // pred_region
    %s113 = sadd.s32 0, 0
    %s114 = smul.u32 4, %s113
    %s115 = ssub.s32 1, %s114
    %s116 = smul.u32 64, %s115
    %p117 = scmp.lt.s32.totalorder %s114, 0
    %s118 = scalar_select %p117, %s114, 0
    %s119 = smul.addr %s118, 4
    %s120 = scalar_lea.vmem %s7, %s119
    %s121 = sadd.s32 0, 0
    %s122 = smul.u32 4, %s121
    %s123 = ssub.s32 1, %s122
    %s124 = smul.u32 64, %s123
  $region33: #{_smooth_l1_head_sums.1} parent=0 // pred_fallthru
    _
  %s125 = sadd.s32 0, 0
  %s126 = smul.u32 4, %s125
  %s127 = ssub.s32 1, %s126
  %s128 = smul.u32 64, %s127
  %p129 = scmp.lt.s32.totalorder %s126, 0
  %s130 = scalar_select %p129, %s126, 0
  %s131 = smul.addr %s130, 4
  %s132 = scalar_lea.vmem %s0, %s131
  %s133 = sadd.s32 0, 0
  %s134 = smul.u32 4, %s133
  %s135 = ssub.s32 1, %s134
  %s136 = smul.u32 64, %s135
  %p137 = scmp.lt.s32.totalorder %s134, 0
  %s138 = scalar_select %p137, %s134, 0
  %s139 = smul.addr %s138, 4
  %s140 = scalar_lea.vmem %s1, %s139
  %s141 = sadd.s32 0, 0
  %s142 = smul.u32 4, %s141
  %s143 = ssub.s32 1, %s142
  %s144 = smul.u32 64, %s143
  %p145 = scmp.lt.s32.totalorder %s142, 0
  %s146 = scalar_select %p145, %s142, 0
  %s147 = smul.addr %s146, 4
  %s148 = scalar_lea.vmem %s2, %s147
  %s149 = sadd.s32 0, 0
  %s150 = smul.u32 4, %s149
  %s151 = ssub.s32 1, %s150
  %s152 = smul.u32 64, %s151
  %p153 = scmp.lt.s32.totalorder %s150, 0
  %s154 = scalar_select %p153, %s150, 0
  %s155 = smul.addr %s154, 4
  %s156 = scalar_lea.vmem %s3, %s155
  %s157 = sadd.s32 0, 0
  %s158 = smul.u32 4, %s157
  %s159 = ssub.s32 1, %s158
  %s160 = smul.u32 64, %s159
  %p161 = scmp.lt.s32.totalorder %s158, 0
  %s162 = scalar_select %p161, %s158, 0
  %s163 = smul.addr %s162, 4
  %s164 = scalar_lea.vmem %s4, %s163
  %s165 = sadd.s32 0, 0
  %s166 = smul.u32 4, %s165
  %s167 = ssub.s32 1, %s166
  %s168 = smul.u32 64, %s167
  %p169 = scmp.lt.s32.totalorder %s166, 0
  %s170 = scalar_select %p169, %s166, 0
  %s171 = smul.addr %s170, 4
  %s172 = scalar_lea.vmem %s5, %s171
  %s173 = sadd.s32 0, 0
  %s174 = smul.u32 4, %s173
  %s175 = ssub.s32 1, %s174
  %s176 = smul.u32 64, %s175
  %p177 = scmp.lt.s32.totalorder %s174, 0
  %s178 = scalar_select %p177, %s174, 0
  %s179 = smul.addr %s178, 4
  %s180 = scalar_lea.vmem %s6, %s179
  %s181 = sadd.s32 0, 0
  %s182 = smul.u32 4, %s181
  %s183 = ssub.s32 1, %s182
  %s184 = smul.u32 64, %s183
  %p185 = scmp.lt.s32.totalorder %s182, 0
  %s186 = scalar_select %p185, %s182, 0
  %s187 = smul.addr %s186, 4
  %s188 = scalar_lea.vmem %s7, %s187
  %s189 = sadd.s32 0, 0
  %s190 = smul.u32 4, %s189
  %s191 = ssub.s32 1, %s190
  %s192 = smul.u32 64, %s191
  %p193 = scmp.lt.s32.totalorder %s190, 0
  %s194 = scalar_select %p193, %s190, 0
  %s195 = smul.addr %s194, 4
  %s196 = scalar_lea.vmem %s0, %s195
  %s197 = sadd.s32 0, 0
  %s198 = smul.u32 4, %s197
  %s199 = ssub.s32 1, %s198
  %s200 = smul.u32 64, %s199
  %s201 = sadd.s32 0, 0
  %s202 = smul.u32 4, %s201
  %s203 = ssub.s32 1, %s202
  %s204 = smul.u32 64, %s203
  %p205 = scmp.lt.s32.totalorder %s202, 0
  %s206 = scalar_select %p205, %s202, 0
  %s207 = smul.addr %s206, 4
  %s208 = scalar_lea.vmem %s1, %s207
  %s209 = sadd.s32 0, 0
  %s210 = smul.u32 4, %s209
  %s211 = ssub.s32 1, %s210
  %s212 = smul.u32 64, %s211
  %s213 = sadd.s32 0, 0
  %s214 = smul.u32 4, %s213
  %s215 = ssub.s32 1, %s214
  %s216 = smul.u32 64, %s215
  %p217 = scmp.lt.s32.totalorder %s214, 0
  %s218 = scalar_select %p217, %s214, 0
  %s219 = smul.addr %s218, 4
  %s220 = scalar_lea.vmem %s2, %s219
  %s221 = sadd.s32 0, 0
  %s222 = smul.u32 4, %s221
  %s223 = ssub.s32 1, %s222
  %s224 = smul.u32 64, %s223
  %s225 = sadd.s32 0, 0
  %s226 = smul.u32 4, %s225
  %s227 = ssub.s32 1, %s226
  %s228 = smul.u32 64, %s227
  %p229 = scmp.lt.s32.totalorder %s226, 0
  %s230 = scalar_select %p229, %s226, 0
  %s231 = smul.addr %s230, 4
  %s232 = scalar_lea.vmem %s3, %s231
  %s233 = sadd.s32 0, 0
  %s234 = smul.u32 4, %s233
  %s235 = ssub.s32 1, %s234
  %s236 = smul.u32 64, %s235
  %s237 = sadd.s32 0, 0
  %s238 = smul.u32 4, %s237
  %s239 = ssub.s32 1, %s238
  %s240 = smul.u32 64, %s239
  %p241 = scmp.lt.s32.totalorder %s238, 0
  %s242 = scalar_select %p241, %s238, 0
  %s243 = smul.addr %s242, 4
  %s244 = scalar_lea.vmem %s4, %s243
  %s245 = sadd.s32 0, 0
  %s246 = smul.u32 4, %s245
  %s247 = ssub.s32 1, %s246
  %s248 = smul.u32 64, %s247
  %s249 = sadd.s32 0, 0
  %s250 = smul.u32 4, %s249
  %s251 = ssub.s32 1, %s250
  %s252 = smul.u32 64, %s251
  %p253 = scmp.lt.s32.totalorder %s250, 0
  %s254 = scalar_select %p253, %s250, 0
  %s255 = smul.addr %s254, 4
  %s256 = scalar_lea.vmem %s5, %s255
  %s257 = sadd.s32 0, 0
  %s258 = smul.u32 4, %s257
  %s259 = ssub.s32 1, %s258
  %s260 = smul.u32 64, %s259
  %s261 = sadd.s32 0, 0
  %s262 = smul.u32 4, %s261
  %s263 = ssub.s32 1, %s262
  %s264 = smul.u32 64, %s263
  %p265 = scmp.lt.s32.totalorder %s262, 0
  %s266 = scalar_select %p265, %s262, 0
  %s267 = smul.addr %s266, 4
  %s268 = scalar_lea.vmem %s6, %s267
  %s269 = sadd.s32 0, 0
  %s270 = smul.u32 4, %s269
  %s271 = ssub.s32 1, %s270
  %s272 = smul.u32 64, %s271
  %s273 = sadd.s32 0, 0
  %s274 = smul.u32 4, %s273
  %s275 = ssub.s32 1, %s274
  %s276 = smul.u32 64, %s275
  %p277 = scmp.lt.s32.totalorder %s274, 0
  %s278 = scalar_select %p277, %s274, 0
  %s279 = smul.addr %s278, 4
  %s280 = scalar_lea.vmem %s7, %s279
  %s281 = sadd.s32 0, 0
  %s282 = smul.u32 4, %s281
  %s283 = ssub.s32 1, %s282
  %s284 = smul.u32 64, %s283
  %p285 = scmp.eq.s32.totalorder 0, 0
  // Predicated region
  $region34: #{_smooth_l1_head_sums.1} parent=0 // pred_check
    %p286 = pneg %p285
  $region35: #{_smooth_l1_head_sums.1} parent=0 // pred_check_branch
    %288 = sbr.rel (%p286) target = $region37
  $region36: #{_smooth_l1_head_sums.1} parent=0 // pred_region
    %289 = vst [vmem:[%s8] sm:$0xff] 0.0
    %290 = vst [vmem:[%s8 + $0x8] sm:$0xff] 0.0
    %291 = vst [vmem:[%s8 + $0x10] sm:$0xff] 0.0
    %292 = vst [vmem:[%s8 + $0x18] sm:$0xff] 0.0
  $region37: #{_smooth_l1_head_sums.1} parent=0 // pred_fallthru
    _
  %s293 = sadd.s32 0, 0
  %s294 = smul.u32 %s293, 16
  %v295 = vlaneseq
  %v296 = vshrl.u32 %v295, 7
  %v297 = vadd.s32 %v296, 8
  %v298 = vstv %s294
  %v299 = vadd.s32 %v296, %v298
  %v300 = vadd.s32 %v297, %v298
  %vm301 = vcmp.lt.s32.totalorder %v299, 4
  %vm302 = vcmp.lt.s32.totalorder %v300, 4
  %v303 = vld [vmem:[%s8] sm:$0xff]
  %v304 = vld [vmem:[%s196] sm:$0xff]
  %v305 = vld [vmem:[%s196 + $0x8] sm:$0xff]
  %v306 = vld [vmem:[%s244] sm:$0xff]
  %v307 = vld [vmem:[%s244 + $0x8] sm:$0xff]
  %v308 = vsub.f32 %v304, %v306
  %v309 = vsub.f32 %v305, %v307
  %v310 = vand.u32 2147483647, %v308
  %v311 = vand.u32 2147483647, %v309
  %v312 = vmin.f32 %v310, 1.0
  %v313 = vmin.f32 %v311, 1.0
  %v314 = vmul.f32 %v312, 0.5
  %v315 = vmul.f32 %v313, 0.5
  %v316 = vsub.f32 %v310, %v314
  %v317 = vsub.f32 %v311, %v315
  %v318 = vmul.f32 %v312, %v316
  %v319 = vmul.f32 %v313, %v317
  %v320 = vsel %vm301, %v318, 0.0
  %v321 = vsel %vm302, %v319, 0.0
  %v322 = vadd.f32 %v320, %v321
  %v323 = vadd.f32 %v303, %v322
  %324 = vst [vmem:[%s8] sm:$0xff] %v323
  %s325 = scalar_lea.vmem %s8, 8
  %v326 = vld [vmem:[%s325] sm:$0xff]
  %v327 = vld [vmem:[%s208] sm:$0xff]
  %v328 = vld [vmem:[%s208 + $0x8] sm:$0xff]
  %v329 = vld [vmem:[%s256] sm:$0xff]
  %v330 = vld [vmem:[%s256 + $0x8] sm:$0xff]
  %v331 = vsub.f32 %v327, %v329
  %v332 = vsub.f32 %v328, %v330
  %v333 = vand.u32 2147483647, %v331
  %v334 = vand.u32 2147483647, %v332
  %v335 = vmin.f32 %v333, 1.0
  %v336 = vmin.f32 %v334, 1.0
  %v337 = vmul.f32 %v335, 0.5
  %v338 = vmul.f32 %v336, 0.5
  %v339 = vsub.f32 %v333, %v337
  %v340 = vsub.f32 %v334, %v338
  %v341 = vmul.f32 %v335, %v339
  %v342 = vmul.f32 %v336, %v340
  %v343 = vsel %vm301, %v341, 0.0
  %v344 = vsel %vm302, %v342, 0.0
  %v345 = vadd.f32 %v343, %v344
  %v346 = vadd.f32 %v326, %v345
  %347 = vst [vmem:[%s325] sm:$0xff] %v346
  %s348 = scalar_lea.vmem %s8, 16
  %v349 = vld [vmem:[%s348] sm:$0xff]
  %v350 = vld [vmem:[%s220] sm:$0xff]
  %v351 = vld [vmem:[%s220 + $0x8] sm:$0xff]
  %v352 = vld [vmem:[%s268] sm:$0xff]
  %v353 = vld [vmem:[%s268 + $0x8] sm:$0xff]
  %v354 = vsub.f32 %v350, %v352
  %v355 = vsub.f32 %v351, %v353
  %v356 = vand.u32 2147483647, %v354
  %v357 = vand.u32 2147483647, %v355
  %v358 = vmin.f32 %v356, 1.0
  %v359 = vmin.f32 %v357, 1.0
  %v360 = vmul.f32 %v358, 0.5
  %v361 = vmul.f32 %v359, 0.5
  %v362 = vsub.f32 %v356, %v360
  %v363 = vsub.f32 %v357, %v361
  %v364 = vmul.f32 %v358, %v362
  %v365 = vmul.f32 %v359, %v363
  %v366 = vsel %vm301, %v364, 0.0
  %v367 = vsel %vm302, %v365, 0.0
  %v368 = vadd.f32 %v366, %v367
  %v369 = vadd.f32 %v349, %v368
  %370 = vst [vmem:[%s348] sm:$0xff] %v369
  %s371 = scalar_lea.vmem %s8, 24
  %v372 = vld [vmem:[%s371] sm:$0xff]
  %v373 = vld [vmem:[%s232] sm:$0xff]
  %v374 = vld [vmem:[%s232 + $0x8] sm:$0xff]
  %v375 = vld [vmem:[%s280] sm:$0xff]
  %v376 = vld [vmem:[%s280 + $0x8] sm:$0xff]
  %v377 = vsub.f32 %v373, %v375
  %v378 = vsub.f32 %v374, %v376
  %v379 = vand.u32 2147483647, %v377
  %v380 = vand.u32 2147483647, %v378
  %v381 = vmin.f32 %v379, 1.0
  %v382 = vmin.f32 %v380, 1.0
  %v383 = vmul.f32 %v381, 0.5
  %v384 = vmul.f32 %v382, 0.5
  %v385 = vsub.f32 %v379, %v383
  %v386 = vsub.f32 %v380, %v384
  %v387 = vmul.f32 %v381, %v385
  %v388 = vmul.f32 %v382, %v386
  %v389 = vsel %vm301, %v387, 0.0
  %v390 = vsel %vm302, %v388, 0.0
  %v391 = vadd.f32 %v389, %v390
  %v392 = vadd.f32 %v372, %v391
  %393 = vst [vmem:[%s371] sm:$0xff] %v392
  // Predicated region
  $region38: #{_smooth_l1_head_sums.1} parent=0 // pred_check
    _
  $region39: #{_smooth_l1_head_sums.1} parent=0 // pred_check_branch
    %395 = sbr.rel (0) target = $region41
  $region40: #{_smooth_l1_head_sums.1} parent=0 // pred_region
    _
  $region41: #{_smooth_l1_head_sums.1} parent=0 // pred_fallthru
    _
  // Predicated region
  $region42: #{_smooth_l1_head_sums.1} parent=0 // pred_check
    _
  $region43: #{_smooth_l1_head_sums.1} parent=0 // pred_check_branch
    %397 = sbr.rel (0) target = $region45
  $region44: #{_smooth_l1_head_sums.1} parent=0 // pred_region
    _
  $region45: #{_smooth_l1_head_sums.1} parent=0 // pred_fallthru
    _

</llo_original>
